<compile_context>
chip_gen: v7x
topology: tpu7x:2x2x1
jax: 0.10.0
libtpu: 0.0.40
codegen_flags: <defaults>
</compile_context>

<pallas_src>
import jax
import jax.numpy as jnp
from jax.experimental import pallas as pl
from jax.experimental.pallas import tpu as pltpu

DEGREE = 3          # polynomial degree (nn.Linear has DEGREE + 1 input features)
LANES = 512         # lane-dense width (multiple of 128)
TILE_R_MAX = 1024   # rows per block -> 1024*512*4B = 2 MiB per buffer


def _round_up(n, m):
    return ((n + m - 1) // m) * m


def poly_linear_kernel(w_ref, b_ref, x_ref, o_ref):
    # w_ref: (1, DEGREE+1) f32 in SMEM, b_ref: (1,) f32 in SMEM
    # x_ref / o_ref: (tile_r, LANES) f32 tiles in VMEM
    x = x_ref[...]
    # Horner's rule: (((w_d * x + w_{d-1}) * x + ...) * x + (w_0 + bias))
    # Start with a multiply so there is no full-tile broadcast fill.
    c1 = w_ref[0, DEGREE - 1]
    if DEGREE == 1:                      # fold bias if the constant term is next
        c1 = c1 + b_ref[0]
    acc = x * w_ref[0, DEGREE] + c1
    for i in range(DEGREE - 2, -1, -1):  # statically unrolled (degree is small)
        c = w_ref[0, i]
        if i == 0:
            c = c + b_ref[0]             # fold bias into the x^0 coefficient
        acc = acc * x + c
    o_ref[...] = acc


def _horner_jax(x_flat, weight, bias):
    # Plain-JAX Horner for the (< LANES) unaligned tail; same math as the kernel.
    acc = jnp.full_like(x_flat, weight[0, DEGREE])
    for i in range(DEGREE - 1, -1, -1):
        c = weight[0, i]
        if i == 0:
            c = c + bias[0]
        acc = acc * x_flat + c
    return acc


@jax.jit
def polynomial_model(x, weight, bias):
    """x: (N, 1) f32; weight: (1, DEGREE+1) f32 (torch Linear layout); bias: (1,) f32.

    Returns (N, 1) f32, identical semantics to
        torch.nn.Linear(DEGREE+1, 1)(hstack([x**i for i in 0..DEGREE])).
    """
    N, one = x.shape
    assert one == 1, "PolynomialModel expects a single input feature per row"

    flat = x.reshape(-1)
    n_bulk = (N // LANES) * LANES        # aligned prefix handled by the kernel

    pieces = []
    if n_bulk > 0:
        rows = n_bulk // LANES
        # Clamp the block to the problem size for small N (keep sublane dim a
        # multiple of 8 so the (8,128) BlockSpec constraint holds).
        tile_r = min(TILE_R_MAX, _round_up(rows, 8))
        # Pure reshape (no copy) when N is already a multiple of LANES.
        x2d = flat[:n_bulk].reshape(rows, LANES)

        out2d = pl.pallas_call(
            poly_linear_kernel,
            out_shape=jax.ShapeDtypeStruct((rows, LANES), jnp.float32),
            grid=(pl.cdiv(rows, tile_r),),
            in_specs=[
                pl.BlockSpec(memory_space=pltpu.MemorySpace.SMEM),   # weight (scalar table)
                pl.BlockSpec(memory_space=pltpu.MemorySpace.SMEM),   # bias   (scalar table)
                pl.BlockSpec((tile_r, LANES), lambda i: (i, 0)),     # x tile (lane-dense)
            ],
            out_specs=pl.BlockSpec((tile_r, LANES), lambda i: (i, 0)),
            compiler_params=pltpu.CompilerParams(
                dimension_semantics=("parallel",)),
        )(weight, bias, x2d)
        pieces.append(out2d.reshape(-1))

    if n_bulk < N:
        # TODO(synk): the < LANES-element unaligned tail is evaluated in plain
        # JAX (same Horner) to avoid padding / slicing the whole array in HBM.
        pieces.append(_horner_jax(flat[n_bulk:], weight, bias))

    out_flat = pieces[0] if len(pieces) == 1 else jnp.concatenate(pieces)
    return out_flat.reshape(N, 1)


def polynomial_model_ref(x, weight, bias):
    # pure-JAX reference: hstack([x**i for i in 0..d]) @ W.T + b
    feats = jnp.concatenate([x ** i for i in range(DEGREE + 1)], axis=1)  # (N, d+1)
    return feats @ weight.T + bias[None, :]


if __name__ == "__main__":
    key = jax.random.PRNGKey(0)
    kx, kw, kb = jax.random.split(key, 3)

    # Deterministic "Linear(degree+1, 1)" parameters (torch layout: weight (1, d+1), bias (1,))
    weight = jax.random.normal(kw, (1, DEGREE + 1), dtype=jnp.float32) * 0.1
    bias = jax.random.normal(kb, (1,), dtype=jnp.float32) * 0.1

    # Aligned N: zero-copy lane-dense path, everything through the kernel.
    N = 4096
    x = jax.random.normal(kx, (N, 1), dtype=jnp.float32)
    out = jax.block_until_ready(polynomial_model(x, weight, bias))
    ref = polynomial_model_ref(x, weight, bias)
    assert out.shape == (N, 1)
    assert jnp.allclose(out, ref, atol=1e-5, rtol=1e-5)

    # Unaligned N: kernel handles the 512-aligned bulk, tail done in plain JAX.
    N2 = 1000
    x2 = jax.random.normal(kx, (N2, 1), dtype=jnp.float32)
    out2 = jax.block_until_ready(polynomial_model(x2, weight, bias))
    ref2 = polynomial_model_ref(x2, weight, bias)
    assert out2.shape == (N2, 1)
    assert jnp.allclose(out2, ref2, atol=1e-5, rtol=1e-5)

    print("KERNEL_OK")
</pallas_src>

<mosaic_0001>
module attributes {stable_mosaic.version = 11 : i64} {
  func.func @poly_linear_kernel(%arg0: i32, %arg1: memref<1x4xf32, #tpu.memory_space<smem>>, %arg2: memref<1xf32, #tpu.memory_space<smem>>, %arg3: memref<8x512xf32, #tpu.memory_space<vmem>>, %arg4: memref<8x512xf32, #tpu.memory_space<vmem>>) attributes {dimension_semantics = [#tpu.dimension_semantics<parallel>], iteration_bounds = array<i64: 1>, scalar_prefetch = 0 : i64, scratch_operands = 0 : i64, tpu.core_type = #tpu.core_type<tc>, window_params = [{transform_indices = @transform_0, window_bounds = array<i64: 1, 4>}, {transform_indices = @transform_1, window_bounds = array<i64: 1>}, {transform_indices = @transform_2, window_bounds = array<i64: 8, 512>}, {transform_indices = @transform_3, window_bounds = array<i64: 8, 512>}]} {
    %c0 = arith.constant 0 : index
    %c0_0 = arith.constant 0 : index
    %0 = vector.load %arg3[%c0, %c0_0] : memref<8x512xf32, #tpu.memory_space<vmem>>, vector<8x512xf32>
    %c0_1 = arith.constant 0 : index
    %c2 = arith.constant 2 : index
    %1 = memref.load %arg1[%c0_1, %c2] : memref<1x4xf32, #tpu.memory_space<smem>>
    %c0_2 = arith.constant 0 : index
    %c3 = arith.constant 3 : index
    %2 = memref.load %arg1[%c0_2, %c3] : memref<1x4xf32, #tpu.memory_space<smem>>
    %3 = vector.broadcast %2 : f32 to vector<8x512xf32>
    %4 = arith.mulf %0, %3 : vector<8x512xf32>
    %5 = vector.broadcast %1 : f32 to vector<8x512xf32>
    %6 = arith.addf %4, %5 : vector<8x512xf32>
    %c0_3 = arith.constant 0 : index
    %c1 = arith.constant 1 : index
    %7 = memref.load %arg1[%c0_3, %c1] : memref<1x4xf32, #tpu.memory_space<smem>>
    %8 = arith.mulf %6, %0 : vector<8x512xf32>
    %9 = vector.broadcast %7 : f32 to vector<8x512xf32>
    %10 = arith.addf %8, %9 : vector<8x512xf32>
    %c0_4 = arith.constant 0 : index
    %c0_5 = arith.constant 0 : index
    %11 = memref.load %arg1[%c0_4, %c0_5] : memref<1x4xf32, #tpu.memory_space<smem>>
    %c0_6 = arith.constant 0 : index
    %12 = memref.load %arg2[%c0_6] : memref<1xf32, #tpu.memory_space<smem>>
    %13 = arith.addf %11, %12 : f32
    %14 = arith.mulf %10, %0 : vector<8x512xf32>
    %15 = vector.broadcast %13 : f32 to vector<8x512xf32>
    %16 = arith.addf %14, %15 : vector<8x512xf32>
    %c0_7 = arith.constant 0 : index
    %c0_8 = arith.constant 0 : index
    %17 = vector.load %arg4[%c0_7, %c0_8] : memref<8x512xf32, #tpu.memory_space<vmem>>, vector<8x512xf32>
    tpu.vector_store %arg4[%c0_7, %c0_8], %16 {strides = array<i32>} : memref<8x512xf32, #tpu.memory_space<vmem>>, vector<8x512xf32>,
    return
  }
  func.func @transform_0(%arg0: i32) -> (i32, i32) {
    %c0_i32 = arith.constant 0 : i32
    %c0_i32_0 = arith.constant 0 : i32
    %c0_i32_1 = arith.constant 0 : i32
    return %c0_i32, %c0_i32_0 : i32, i32
  }
  func.func @transform_1(%arg0: i32) -> i32 {
    %c0_i32 = arith.constant 0 : i32
    %c0_i32_0 = arith.constant 0 : i32
    return %c0_i32 : i32
  }
  func.func @transform_2(%arg0: i32) -> (i32, i32) {
    %c0_i32 = arith.constant 0 : i32
    %c0_i32_0 = arith.constant 0 : i32
    return %arg0, %c0_i32 : i32, i32
  }
  func.func @transform_3(%arg0: i32) -> (i32, i32) {
    %c0_i32 = arith.constant 0 : i32
    %c0_i32_0 = arith.constant 0 : i32
    return %arg0, %c0_i32 : i32, i32
  }
}

</mosaic_0001>

<llo_original>
// kernel: polynomial_model.1
$region0: #{polynomial_model.1}
  #allocation0 [shape = 'u32[]', space=smem, size = 0x4, offset = 0x4, fixed_abs, tag = 'smem constant byte address 0x4 - core index']
  #allocation1 [shape = 'u32[144,128]{1,0:T(1,128)}', space=vmem, size = 0x12000, scoped, tag = 'internal scratch']
  #allocation2 [shape = 'f32[1]{0:T(128)S(6)}', space=smem, size = 0x200, scoped, tag = 'scoped memory for polynomial_model.1']
  %s0 = inlined_call_operand.vmem [shape: f32[1,4], index: 0, kind: input, shape index: {}]
  %s1 = inlined_call_operand.<no memory space> [shape: f32[1], index: 1, kind: input, shape index: {}]
  %s2 = inlined_call_operand.vmem [shape: f32[8,512], index: 2, kind: input, shape index: {}]
  %s3 = inlined_call_operand.vmem [shape: f32[8,512], index: 3, kind: output, shape index: {}]
  %s4 = sld [smem:[#allocation0]]
  $region26: #{polynomial_model.1} parent=0
    _
  %s6 = ssub.s32 1, %s4
  %s7 = scalar_select 0, %s6, %s4
  %8 = sst [smem:[#allocation2]] %s1
  $region1: #{polynomial_model.1} parent=0
    #allocation3 [shape = 'u8[512]{0}', space=smem, size = 0x200, scoped, tag = 'input window, operand 0, single buffered']
    #allocation4 [shape = 's32[1]{0}', space=sflag, size = 0x4, scoped, tag = 'scoped memory for polynomial_model.1']
    %9 = vsyncpa [#allocation4], 0
    // Predicated region
    $region2: #{polynomial_model.1} parent=1 // pred_check
      _
    $region3: #{polynomial_model.1} parent=1 // pred_check_branch
      %11 = sbr.rel (0) target = $region5
    $region4: #{polynomial_model.1} parent=1 // pred_region
      %s13 = ssub.s32 16, 16
      %14 = vsyncadd [#allocation4], %s13
      %s16 = sshll.u32 %s0, 4
      %s17 = int_to_ptr.vmem [resolvable:$true] %s16
      %19 = dma.vmem_to_smem %s17, 16, [#allocation3], [#allocation4]
    $region5: #{polynomial_model.1} parent=1 // pred_fallthru
      _
    // Predicated region
    $region6: #{polynomial_model.1} parent=1 // pred_check
      _
    $region7: #{polynomial_model.1} parent=1 // pred_check_branch
      %21 = sbr.rel (0) target = $region9
    $region8: #{polynomial_model.1} parent=1 // pred_region
      _
    $region9: #{polynomial_model.1} parent=1 // pred_fallthru
      _
    // Predicated region
    $region10: #{polynomial_model.1} parent=1 // pred_check
      _
    $region11: #{polynomial_model.1} parent=1 // pred_check_branch
      %23 = sbr.rel (0) target = $region13
    $region12: #{polynomial_model.1} parent=1 // pred_region
      _
    $region13: #{polynomial_model.1} parent=1 // pred_fallthru
      _
    // Predicated region
    $region14: #{polynomial_model.1} parent=1 // pred_check
      _
    $region15: #{polynomial_model.1} parent=1 // pred_check_branch
      %25 = sbr.rel (0) target = $region17
    $region16: #{polynomial_model.1} parent=1 // pred_region
      %26 = dma.done [#allocation4], 16
    $region17: #{polynomial_model.1} parent=1 // pred_fallthru
      _
    %27 = sfence
    %v28 = vld [vmem:[%s2] sm:$0xff]
    %v29 = vld [vmem:[%s2 + $0x8] sm:$0xff]
    %v30 = vld [vmem:[%s2 + $0x10] sm:$0xff]
    %v31 = vld [vmem:[%s2 + $0x18] sm:$0xff]
    %s32 = sld [smem:[#allocation3 + $0x2]]
    %s33 = sld [smem:[#allocation3 + $0x3]]
    %v34 = vstv %s33
    %v35 = vmul.f32 %v28, %v34
    %v36 = vmul.f32 %v29, %v34
    %v37 = vmul.f32 %v30, %v34
    %v38 = vmul.f32 %v31, %v34
    %v39 = vstv %s32
    %v40 = vadd.f32 %v35, %v39
    %v41 = vadd.f32 %v36, %v39
    %v42 = vadd.f32 %v37, %v39
    %v43 = vadd.f32 %v38, %v39
    %s44 = sld [smem:[#allocation3 + $0x1]]
    %v45 = vmul.f32 %v40, %v28
    %v46 = vmul.f32 %v41, %v29
    %v47 = vmul.f32 %v42, %v30
    %v48 = vmul.f32 %v43, %v31
    %v49 = vstv %s44
    %v50 = vadd.f32 %v45, %v49
    %v51 = vadd.f32 %v46, %v49
    %v52 = vadd.f32 %v47, %v49
    %v53 = vadd.f32 %v48, %v49
    %s54 = sld [smem:[#allocation3]]
    %s55 = sld [smem:[#allocation2]]
    %s56 = sadd.f32 %s54, %s55
    %v57 = vmul.f32 %v50, %v28
    %v58 = vmul.f32 %v51, %v29
    %v59 = vmul.f32 %v52, %v30
    %v60 = vmul.f32 %v53, %v31
    %v61 = vstv %s56
    %v62 = vadd.f32 %v57, %v61
    %v63 = vadd.f32 %v58, %v61
    %v64 = vadd.f32 %v59, %v61
    %v65 = vadd.f32 %v60, %v61
    %66 = vst [vmem:[%s3] sm:$0xff] %v62
    %67 = vst [vmem:[%s3 + $0x8] sm:$0xff] %v63
    %68 = vst [vmem:[%s3 + $0x10] sm:$0xff] %v64
    %69 = vst [vmem:[%s3 + $0x18] sm:$0xff] %v65
    // Predicated region
    $region18: #{polynomial_model.1} parent=1 // pred_check
      _
    $region19: #{polynomial_model.1} parent=1 // pred_check_branch
      %71 = sbr.rel (0) target = $region21
    $region20: #{polynomial_model.1} parent=1 // pred_region
      _
    $region21: #{polynomial_model.1} parent=1 // pred_fallthru
      _
    // Predicated region
    $region22: #{polynomial_model.1} parent=1 // pred_check
      _
    $region23: #{polynomial_model.1} parent=1 // pred_check_branch
      %73 = sbr.rel (0) target = $region25
    $region24: #{polynomial_model.1} parent=1 // pred_region
      _
    $region25: #{polynomial_model.1} parent=1 // pred_fallthru
      _
    %74 = vsyncpa [#allocation4], 1

</llo_original>
